<compile_context>
chip_gen: v6e
topology: v6e:2x2x1
jax: 0.10.0
libtpu: 0.0.40
codegen_flags: <defaults>
</compile_context>

<pallas_src>
import functools

import jax
import jax.numpy as jnp
from jax import lax
from jax.experimental import pallas as pl
from jax.experimental.pallas import tpu as pltpu


def _round_up(x, m):
    return (x + m - 1) // m * m


def players_kernel(img_ref, p_ref, out_ref, *, G, F, H, V):
    """Fused sender+receiver forward for one batch tile.

    img_ref: (bm, 2*G*F)  lanes [0, G*F) = flattened sender images,
                          lanes [G*F + g*F, G*F + (g+1)*F) = receiver image g.
    p_ref:   (rows, 128)  lane-densely packed parameter slab (see pack_params).
    out_ref: (bm, out_w)  packed outputs:
             [one_hot_signal(V) | sender_probs(V) | s_emb(H) | r_emb(H) |
              one_hot_output(G) | receiver_probs(G) | zero pad]
    """
    GF = G * F

    # ---- unpack the lane-dense parameter slab (static sub-window loads) ----
    ws1 = p_ref[0:GF, 0:H]                          # (G*F, H)
    wimg_t = p_ref[0:H, H:H + F]                    # (H, F)  == wimg.T
    ws2 = p_ref[0:H, H + F:H + F + V]               # (H, V)
    bs2 = p_ref[H:H + 1, H + F:H + F + V]           # (1, V)
    wmsg = p_ref[0:V, H + F + V:H + F + V + H]      # (V, H)
    bs1 = p_ref[V:V + 1, H + F + V:H + F + V + H]   # (1, H)

    def softmax(logits):
        m = jnp.max(logits, axis=-1, keepdims=True)
        e = jnp.exp(logits - m)
        return e / jnp.sum(e, axis=-1, keepdims=True)   # exact (rows sum to 1)

    def onehot_argmax(x):
        n = x.shape[-1]
        m = jnp.max(x, axis=-1, keepdims=True)
        iota = lax.broadcasted_iota(jnp.int32, x.shape, x.ndim - 1)
        # first index attaining the max (matches torch.argmax tie-breaking)
        masked = jnp.where(x == m, iota, n)
        first = jnp.min(masked, axis=-1, keepdims=True)
        return (iota == first).astype(jnp.float32)

    img = img_ref[...]                                                  # (bm, 2*G*F)

    # ---------------- sender ----------------
    img_s = img[:, 0:GF]                                                # (bm, G*F)
    s_emb = jnp.tanh(
        jnp.dot(img_s, ws1, preferred_element_type=jnp.float32) + bs1)  # (bm, H)
    s_logits = (jnp.dot(s_emb, ws2, preferred_element_type=jnp.float32)
                + bs2)                                                  # (bm, V)
    # argmax(softmax(x)) == argmax(x): keep exp off the critical path.
    one_hot_signal = onehot_argmax(s_logits)                            # (bm, V)
    sender_probs = softmax(s_logits)                                    # (bm, V)

    # ---------------- receiver ----------------
    r_emb = jnp.dot(one_hot_signal, wmsg,
                    preferred_element_type=jnp.float32)                 # (bm, H)
    # scores[b, g] = (img_r_g @ wimg) . r_emb[b]  ==  img_r_g . (r_emb @ wimg.T)
    proj = jnp.dot(r_emb, wimg_t, preferred_element_type=jnp.float32)   # (bm, F)
    score_cols = []
    for g in range(G):                                                  # static, tiny
        img_rg = img[:, GF + g * F:GF + (g + 1) * F]                    # (bm, F)
        score_cols.append(jnp.sum(img_rg * proj, axis=-1, keepdims=True))
    scores = jnp.concatenate(score_cols, axis=-1)                       # (bm, G)
    one_hot_output = onehot_argmax(scores)                              # (bm, G)
    receiver_probs = softmax(scores)                                    # (bm, G)

    # ---- single lane-dense packed output slab: one unmasked store ----
    bm = out_ref.shape[0]
    used = 2 * V + 2 * H + 2 * G
    parts = [one_hot_signal, sender_probs, s_emb, r_emb,
             one_hot_output, receiver_probs]
    pad = out_ref.shape[1] - used
    if pad > 0:
        parts.append(jnp.zeros((bm, pad), jnp.float32))
    out_ref[...] = jnp.concatenate(parts, axis=-1)


def pack_params(params, game_size, feat_dim):
    """Pack all 6 parameter tensors into one lane-dense (rows, 128) f32 slab.

    Lane layout:  [ ws1 (0:H) | wimg.T (H:H+F) | ws2,bs2 (H+F:H+F+V) |
                    wmsg,bs1 (H+F+V:H+F+V+H) ]
    Build this ONCE (outside the per-step path) and reuse it.
    """
    G, F = game_size, feat_dim
    H = params['ws1'].shape[1]
    V = params['ws2'].shape[1]
    GF = G * F
    assert 2 * H + F + V <= 128, "lane-dense slab layout needs 2H+F+V <= 128"
    # TODO(synk): add a row-stacked fallback layout when 2H+F+V > 128.
    n_rows = _round_up(max(GF, H + 1, V + 1), 8)

    slab = jnp.zeros((n_rows, 128), jnp.float32)
    slab = slab.at[0:GF, 0:H].set(params['ws1'].astype(jnp.float32))
    slab = slab.at[0:H, H:H + F].set(params['wimg'].T.astype(jnp.float32))
    slab = slab.at[0:H, H + F:H + F + V].set(params['ws2'].astype(jnp.float32))
    slab = slab.at[H:H + 1, H + F:H + F + V].set(
        params['bs2'].reshape(1, V).astype(jnp.float32))
    slab = slab.at[0:V, H + F + V:H + F + V + H].set(
        params['wmsg'].astype(jnp.float32))
    slab = slab.at[V:V + 1, H + F + V:H + F + V + H].set(
        params['bs1'].reshape(1, H).astype(jnp.float32))
    return slab


def players_forward(images_vectors, images_vectors_receiver, params, *,
                    param_slab=None, block_b=None):
    B, G, F = images_vectors.shape
    H = params['ws1'].shape[1]
    V = params['ws2'].shape[1]
    GF = G * F

    # prebuilt (cached) lane-dense parameter slab -> one small input DMA
    if param_slab is None:
        param_slab = pack_params(params, G, F)
    n_rows = param_slab.shape[0]

    # merge sender + receiver images into ONE lane-dense slab: 2 input DMAs
    # total, no wrapper-side transpose of the receiver tensor.
    img_all = jnp.concatenate(
        [images_vectors.reshape(B, GF).astype(jnp.float32),
         images_vectors_receiver.reshape(B, GF).astype(jnp.float32)],
        axis=-1)                                                     # (B, 2*G*F)

    # batch tiling: multiple-of-8 tiles; pad B (never block_b = B fallback) so
    # large batches keep >= 2 grid steps -> v7x megacore sharding + pipelining,
    # bounded per-tile VMEM. Demo B=8 -> block_b=8, grid=(1,).
    if block_b is None:
        block_b = min(_round_up(B, 8), 512)
    block_b = max(8, (block_b // 8) * 8)
    Bp = _round_up(B, block_b)
    if Bp != B:
        img_all = jnp.pad(img_all, ((0, Bp - B), (0, 0)))
    grid = (Bp // block_b,)

    # packed output slab width (lane-dense, multiple of 128)
    out_w = _round_up(2 * V + 2 * H + 2 * G, 128)

    kernel = functools.partial(players_kernel, G=G, F=F, H=H, V=V)
    slab_out = pl.pallas_call(
        kernel,
        out_shape=jax.ShapeDtypeStruct((Bp, out_w), jnp.float32),
        grid_spec=pltpu.PrefetchScalarGridSpec(
            num_scalar_prefetch=0,
            grid=grid,
            in_specs=[
                pl.BlockSpec((block_b, 2 * GF), lambda i: (i, 0)),
                pl.BlockSpec((n_rows, 128), lambda i: (0, 0)),
            ],
            out_specs=pl.BlockSpec((block_b, out_w), lambda i: (i, 0)),
        ),
        compiler_params=pltpu.CompilerParams(
            dimension_semantics=("parallel",)),
    )(img_all, param_slab)

    # slice the packed slab back into the six module outputs (lane-aligned order)
    c = 0
    one_hot_signal = slab_out[:B, c:c + V]; c += V
    sender_probs = slab_out[:B, c:c + V]; c += V
    s_emb = slab_out[:B, c:c + H]; c += H
    r_emb = slab_out[:B, c:c + H]; c += H
    one_hot_output = slab_out[:B, c:c + G]; c += G
    receiver_probs = slab_out[:B, c:c + G]
    return (one_hot_signal, sender_probs, one_hot_output, receiver_probs,
            s_emb, r_emb)


def players_reference(images_vectors, images_vectors_receiver, params):
    """Plain-JAX forward for correctness comparison."""
    hp = lax.Precision.HIGHEST
    B, G, F = images_vectors.shape
    img_s = images_vectors.reshape(B, G * F)
    s_emb = jnp.tanh(jnp.dot(img_s, params['ws1'], precision=hp) + params['bs1'])
    s_logits = jnp.dot(s_emb, params['ws2'], precision=hp) + params['bs2']
    sender_probs = jax.nn.softmax(s_logits, axis=-1)
    sig = jax.nn.one_hot(jnp.argmax(s_logits, -1), s_logits.shape[-1],
                         dtype=jnp.float32)
    r_emb = jnp.dot(sig, params['wmsg'], precision=hp)
    img_emb = jnp.einsum('bgf,fh->bgh', images_vectors_receiver,
                         params['wimg'], precision=hp)
    scores = jnp.einsum('bgh,bh->bg', img_emb, r_emb, precision=hp)
    receiver_probs = jax.nn.softmax(scores, axis=-1)
    out = jax.nn.one_hot(jnp.argmax(scores, -1), G, dtype=jnp.float32)
    return sig, sender_probs, out, receiver_probs, s_emb, r_emb


def init_params(key, game_size, feat_dim, hidden_dim, vocab_size):
    ks = jax.random.split(key, 6)
    scale = 0.1
    return {
        # sender: flattened images -> hidden -> vocab
        'ws1': scale * jax.random.normal(ks[0], (game_size * feat_dim, hidden_dim), jnp.float32),
        'bs1': jnp.zeros((1, hidden_dim), jnp.float32),
        'ws2': scale * jax.random.normal(ks[1], (hidden_dim, vocab_size), jnp.float32),
        'bs2': jnp.zeros((1, vocab_size), jnp.float32),
        # receiver: symbol embedding and image embedding
        'wmsg': scale * jax.random.normal(ks[2], (vocab_size, hidden_dim), jnp.float32),
        'wimg': scale * jax.random.normal(ks[3], (feat_dim, hidden_dim), jnp.float32),
    }


if __name__ == "__main__":
    B, G, F, H, V = 8, 2, 32, 32, 16   # batch, game_size, feat, hidden, vocab

    key = jax.random.PRNGKey(0)
    k_img_s, k_img_r, k_par = jax.random.split(key, 3)
    images_vectors = jax.random.normal(k_img_s, (B, G, F), jnp.float32)
    images_vectors_receiver = jax.random.normal(k_img_r, (B, G, F), jnp.float32)
    params = init_params(k_par, G, F, H, V)

    # build the parameter slab once (outside the per-step path) and reuse it
    param_slab = pack_params(params, G, F)

    outs = players_forward(images_vectors, images_vectors_receiver, params,
                           param_slab=param_slab)
    outs = jax.block_until_ready(outs)
    one_hot_signal, sender_probs, one_hot_output, receiver_probs, s_emb, r_emb = outs

    # shapes
    assert one_hot_signal.shape == (B, V) and sender_probs.shape == (B, V)
    assert one_hot_output.shape == (B, G) and receiver_probs.shape == (B, G)
    assert s_emb.shape == (B, H) and r_emb.shape == (B, H)

    # one-hot rows sum to 1; probability rows sum to 1 (exact softmax division)
    assert jnp.allclose(one_hot_signal.sum(-1), 1.0)
    assert jnp.allclose(one_hot_output.sum(-1), 1.0)
    assert jnp.allclose(sender_probs.sum(-1), 1.0, atol=1e-3)
    assert jnp.allclose(receiver_probs.sum(-1), 1.0, atol=1e-3)

    # one-hots are consistent with the returned probabilities
    assert jnp.all(jnp.argmax(one_hot_signal, -1) == jnp.argmax(sender_probs, -1))
    assert jnp.all(jnp.argmax(one_hot_output, -1) == jnp.argmax(receiver_probs, -1))

    # compare against a plain-JAX reference forward
    ref = players_reference(images_vectors, images_vectors_receiver, params)
    _, ref_sprobs, _, ref_rprobs, ref_semb, ref_remb = ref
    assert jnp.allclose(sender_probs, ref_sprobs, rtol=2e-2, atol=2e-2)
    assert jnp.allclose(receiver_probs, ref_rprobs, rtol=2e-2, atol=2e-2)
    assert jnp.allclose(s_emb, ref_semb, rtol=2e-2, atol=2e-2)
    assert jnp.allclose(r_emb, ref_remb, rtol=2e-2, atol=2e-2)

    print("KERNEL_OK")
</pallas_src>

<mosaic_0001>
module attributes {stable_mosaic.version = 11 : i64} {
  func.func @players_kernel(%arg0: i32, %arg1: memref<8x128xf32, #tpu.memory_space<vmem>>, %arg2: memref<64x128xf32, #tpu.memory_space<vmem>>, %arg3: memref<8x128xf32, #tpu.memory_space<vmem>>) attributes {dimension_semantics = [#tpu.dimension_semantics<parallel>], iteration_bounds = array<i64: 1>, scalar_prefetch = 0 : i64, scratch_operands = 0 : i64, tpu.core_type = #tpu.core_type<tc>, window_params = [{transform_indices = @transform_0, window_bounds = array<i64: 8, 128>}, {pipeline_mode = #tpu.pipeline_mode<synchronous>, transform_indices = @transform_1, window_bounds = array<i64: 64, 128>}, {transform_indices = @transform_2, window_bounds = array<i64: 8, 128>}]} {
    %c0 = arith.constant 0 : index
    %c0_0 = arith.constant 0 : index
    %0 = vector.load %arg2[%c0, %c0_0] : memref<64x128xf32, #tpu.memory_space<vmem>>, vector<64x32xf32>
    %c0_1 = arith.constant 0 : index
    %c32 = arith.constant 32 : index
    %1 = vector.load %arg2[%c0_1, %c32] : memref<64x128xf32, #tpu.memory_space<vmem>>, vector<32x32xf32>
    %c0_2 = arith.constant 0 : index
    %c64 = arith.constant 64 : index
    %2 = vector.load %arg2[%c0_2, %c64] : memref<64x128xf32, #tpu.memory_space<vmem>>, vector<32x16xf32>
    %c32_3 = arith.constant 32 : index
    %c64_4 = arith.constant 64 : index
    %3 = vector.load %arg2[%c32_3, %c64_4] : memref<64x128xf32, #tpu.memory_space<vmem>>, vector<1x16xf32>
    %c0_5 = arith.constant 0 : index
    %c80 = arith.constant 80 : index
    %4 = vector.load %arg2[%c0_5, %c80] : memref<64x128xf32, #tpu.memory_space<vmem>>, vector<16x32xf32>
    %c16 = arith.constant 16 : index
    %c80_6 = arith.constant 80 : index
    %5 = vector.load %arg2[%c16, %c80_6] : memref<64x128xf32, #tpu.memory_space<vmem>>, vector<1x32xf32>
    %c0_7 = arith.constant 0 : index
    %c0_8 = arith.constant 0 : index
    %6 = vector.load %arg1[%c0_7, %c0_8] : memref<8x128xf32, #tpu.memory_space<vmem>>, vector<8x128xf32>
    %7 = vector.extract_strided_slice %6 {offsets = [0, 0], sizes = [8, 64], strides = [1, 1]} : vector<8x128xf32> to vector<8x64xf32>
    %cst = arith.constant dense<0.000000e+00> : vector<8x32xf32>
    %8 = tpu.matmul %7, %0, %cst {dimension_numbers = #tpu.dot_dimension_numbers<[1], [0], [0], [1], [0, 0, 1, 1], [], []>} : vector<8x64xf32>, vector<64x32xf32>, vector<8x32xf32> -> vector<8x32xf32>
    %9 = vector.broadcast %5 : vector<1x32xf32> to vector<8x32xf32>
    %10 = arith.addf %8, %9 : vector<8x32xf32>
    %11 = math.tanh %10 : vector<8x32xf32>
    %cst_9 = arith.constant dense<0.000000e+00> : vector<8x16xf32>
    %12 = tpu.matmul %11, %2, %cst_9 {dimension_numbers = #tpu.dot_dimension_numbers<[1], [0], [0], [1], [0, 0, 1, 1], [], []>} : vector<8x32xf32>, vector<32x16xf32>, vector<8x16xf32> -> vector<8x16xf32>
    %13 = vector.broadcast %3 : vector<1x16xf32> to vector<8x16xf32>
    %14 = arith.addf %12, %13 : vector<8x16xf32>
    %cst_10 = arith.constant dense<0xFF800000> : vector<8xf32>
    %15 = vector.multi_reduction <maximumf>, %14, %cst_10 [1] : vector<8x16xf32> to vector<8xf32>
    %16 = vector.shape_cast %15 : vector<8xf32> to vector<8x1xf32>
    %17 = tpu.iota {dimensions = array<i32: 1>} : vector<8x16xi32>
    %18 = vector.broadcast %16 : vector<8x1xf32> to vector<8x16xf32>
    %19 = arith.cmpf oeq, %14, %18 : vector<8x16xf32>
    %c16_i32 = arith.constant 16 : i32
    %20 = vector.broadcast %c16_i32 : i32 to vector<8x16xi32>
    %21 = arith.select %19, %17, %20 : vector<8x16xi1>, vector<8x16xi32>
    %cst_11 = arith.constant dense<2147483647> : vector<8xi32>
    %22 = vector.multi_reduction <minsi>, %21, %cst_11 [1] : vector<8x16xi32> to vector<8xi32>
    %23 = vector.shape_cast %22 : vector<8xi32> to vector<8x1xi32>
    %24 = vector.broadcast %23 : vector<8x1xi32> to vector<8x16xi32>
    %25 = arith.cmpi eq, %17, %24 : vector<8x16xi32>
    %26 = arith.extui %25 : vector<8x16xi1> to vector<8x16xi32>
    %27 = arith.sitofp %26 : vector<8x16xi32> to vector<8x16xf32>
    %cst_12 = arith.constant dense<0xFF800000> : vector<8xf32>
    %28 = vector.multi_reduction <maximumf>, %14, %cst_12 [1] : vector<8x16xf32> to vector<8xf32>
    %29 = vector.shape_cast %28 : vector<8xf32> to vector<8x1xf32>
    %30 = vector.broadcast %29 : vector<8x1xf32> to vector<8x16xf32>
    %31 = arith.subf %14, %30 : vector<8x16xf32>
    %32 = math.exp %31 : vector<8x16xf32>
    %cst_13 = arith.constant dense<0.000000e+00> : vector<8xf32>
    %33 = vector.multi_reduction <add>, %32, %cst_13 [1] : vector<8x16xf32> to vector<8xf32>
    %34 = vector.shape_cast %33 : vector<8xf32> to vector<8x1xf32>
    %35 = vector.broadcast %34 : vector<8x1xf32> to vector<8x16xf32>
    %36 = arith.divf %32, %35 : vector<8x16xf32>
    %cst_14 = arith.constant dense<0.000000e+00> : vector<8x32xf32>
    %37 = tpu.matmul %27, %4, %cst_14 {dimension_numbers = #tpu.dot_dimension_numbers<[1], [0], [0], [1], [0, 0, 1, 1], [], []>} : vector<8x16xf32>, vector<16x32xf32>, vector<8x32xf32> -> vector<8x32xf32>
    %cst_15 = arith.constant dense<0.000000e+00> : vector<8x32xf32>
    %38 = tpu.matmul %37, %1, %cst_15 {dimension_numbers = #tpu.dot_dimension_numbers<[1], [0], [0], [1], [0, 0, 1, 1], [], []>} : vector<8x32xf32>, vector<32x32xf32>, vector<8x32xf32> -> vector<8x32xf32>
    %39 = vector.extract_strided_slice %6 {offsets = [0, 64], sizes = [8, 32], strides = [1, 1]} : vector<8x128xf32> to vector<8x32xf32>
    %40 = arith.mulf %39, %38 : vector<8x32xf32>
    %cst_16 = arith.constant dense<0.000000e+00> : vector<8xf32>
    %41 = vector.multi_reduction <add>, %40, %cst_16 [1] : vector<8x32xf32> to vector<8xf32>
    %42 = vector.shape_cast %41 : vector<8xf32> to vector<8x1xf32>
    %43 = vector.extract_strided_slice %6 {offsets = [0, 96], sizes = [8, 32], strides = [1, 1]} : vector<8x128xf32> to vector<8x32xf32>
    %44 = arith.mulf %43, %38 : vector<8x32xf32>
    %cst_17 = arith.constant dense<0.000000e+00> : vector<8xf32>
    %45 = vector.multi_reduction <add>, %44, %cst_17 [1] : vector<8x32xf32> to vector<8xf32>
    %46 = vector.shape_cast %45 : vector<8xf32> to vector<8x1xf32>
    %47 = tpu.concatenate %42, %46 in 1 : vector<8x1xf32>, vector<8x1xf32> -> vector<8x2xf32>
    %cst_18 = arith.constant dense<0xFF800000> : vector<8xf32>
    %48 = vector.multi_reduction <maximumf>, %47, %cst_18 [1] : vector<8x2xf32> to vector<8xf32>
    %49 = vector.shape_cast %48 : vector<8xf32> to vector<8x1xf32>
    %50 = tpu.iota {dimensions = array<i32: 1>} : vector<8x2xi32>
    %51 = vector.broadcast %49 : vector<8x1xf32> to vector<8x2xf32>
    %52 = arith.cmpf oeq, %47, %51 : vector<8x2xf32>
    %c2_i32 = arith.constant 2 : i32
    %53 = vector.broadcast %c2_i32 : i32 to vector<8x2xi32>
    %54 = arith.select %52, %50, %53 : vector<8x2xi1>, vector<8x2xi32>
    %cst_19 = arith.constant dense<2147483647> : vector<8xi32>
    %55 = vector.multi_reduction <minsi>, %54, %cst_19 [1] : vector<8x2xi32> to vector<8xi32>
    %56 = vector.shape_cast %55 : vector<8xi32> to vector<8x1xi32>
    %57 = vector.broadcast %56 : vector<8x1xi32> to vector<8x2xi32>
    %58 = arith.cmpi eq, %50, %57 : vector<8x2xi32>
    %59 = arith.extui %58 : vector<8x2xi1> to vector<8x2xi32>
    %60 = arith.sitofp %59 : vector<8x2xi32> to vector<8x2xf32>
    %cst_20 = arith.constant dense<0xFF800000> : vector<8xf32>
    %61 = vector.multi_reduction <maximumf>, %47, %cst_20 [1] : vector<8x2xf32> to vector<8xf32>
    %62 = vector.shape_cast %61 : vector<8xf32> to vector<8x1xf32>
    %63 = vector.broadcast %62 : vector<8x1xf32> to vector<8x2xf32>
    %64 = arith.subf %47, %63 : vector<8x2xf32>
    %65 = math.exp %64 : vector<8x2xf32>
    %cst_21 = arith.constant dense<0.000000e+00> : vector<8xf32>
    %66 = vector.multi_reduction <add>, %65, %cst_21 [1] : vector<8x2xf32> to vector<8xf32>
    %67 = vector.shape_cast %66 : vector<8xf32> to vector<8x1xf32>
    %68 = vector.broadcast %67 : vector<8x1xf32> to vector<8x2xf32>
    %69 = arith.divf %65, %68 : vector<8x2xf32>
    %cst_22 = arith.constant 0.000000e+00 : f32
    %70 = vector.broadcast %cst_22 : f32 to vector<8x28xf32>
    %71 = tpu.concatenate %27, %36, %11, %37, %60, %69, %70 in 1 : vector<8x16xf32>, vector<8x16xf32>, vector<8x32xf32>, vector<8x32xf32>, vector<8x2xf32>, vector<8x2xf32>, vector<8x28xf32> -> vector<8x128xf32>
    %c0_23 = arith.constant 0 : index
    %c0_24 = arith.constant 0 : index
    %72 = vector.load %arg3[%c0_23, %c0_24] : memref<8x128xf32, #tpu.memory_space<vmem>>, vector<8x128xf32>
    tpu.vector_store %arg3[%c0_23, %c0_24], %71 {strides = array<i32>} : memref<8x128xf32, #tpu.memory_space<vmem>>, vector<8x128xf32>,
    return
  }
  func.func @transform_0(%arg0: i32) -> (i32, i32) {
    %c0_i32 = arith.constant 0 : i32
    %c0_i32_0 = arith.constant 0 : i32
    return %arg0, %c0_i32 : i32, i32
  }
  func.func @transform_1(%arg0: i32) -> (i32, i32) {
    %c0_i32 = arith.constant 0 : i32
    %c0_i32_0 = arith.constant 0 : i32
    %c0_i32_1 = arith.constant 0 : i32
    return %c0_i32, %c0_i32_0 : i32, i32
  }
  func.func @transform_2(%arg0: i32) -> (i32, i32) {
    %c0_i32 = arith.constant 0 : i32
    %c0_i32_0 = arith.constant 0 : i32
    return %arg0, %c0_i32 : i32, i32
  }
}

</mosaic_0001>

<llo_original>
// kernel: tpu_custom_call.1
$region0: #{tpu_custom_call.1}
  #allocation0 [shape = 'u32[]', space=smem, size = 0x4, offset = 0x4, fixed_abs, tag = 'smem constant byte address 0x4 - core index']
  #allocation1 [shape = 'u32[144,128]{1,0:T(1,128)}', space=vmem, size = 0x12000, scoped, tag = 'internal scratch']
  %s0 = inlined_call_operand.hbm [shape: f32[8,128], index: 0, kind: input, shape index: {}]
  %s1 = inlined_call_operand.hbm [shape: f32[64,128], index: 1, kind: input, shape index: {}]
  %s2 = inlined_call_operand.hbm [shape: f32[8,128], index: 2, kind: output, shape index: {}]
  %s3 = sld [smem:[#allocation0]]
  $region26: #{tpu_custom_call.1} parent=0
    _
  %s5 = ssub.s32 1, %s3
  %s6 = scalar_select 0, %s5, %s3
  $region1: #{tpu_custom_call.1} parent=0
    #allocation2 [shape = 'u8[4096]{0}', space=vmem, size = 0x1000, scoped, tag = 'input window, operand 0, single buffered']
    #allocation3 [shape = 's32[1]{0}', space=sflag, size = 0x4, scoped, tag = 'scoped memory for tpu_custom_call.1']
    #allocation4 [shape = 's32[1]{0}', space=sflag, size = 0x4, scoped, tag = 'scoped memory for tpu_custom_call.1']
    #allocation5 [shape = 'u8[32768]{0}', space=vmem, size = 0x8000, scoped, tag = 'input window, operand 1, single buffered']
    #allocation6 [shape = 's32[1]{0}', space=sflag, size = 0x4, scoped, tag = 'scoped memory for tpu_custom_call.1']
    #allocation7 [shape = 'u8[4096]{0}', space=vmem, size = 0x1000, scoped, tag = 'output window, operand 0, single buffered']
    %7 = vsyncpa [#allocation3], 0
    %8 = vsyncpa [#allocation6], 0
    %9 = vsyncpa [#allocation4], 0
    // Predicated region
    $region2: #{tpu_custom_call.1} parent=1 // pred_check
      _
    $region3: #{tpu_custom_call.1} parent=1 // pred_check_branch
      %11 = sbr.rel (0) target = $region5
    $region4: #{tpu_custom_call.1} parent=1 // pred_region
      %s13 = ssub.s32 128, 128
      %14 = vsyncadd [#allocation3], %s13
      %s16 = sshll.u32 [#allocation2], 4
      %s17 = int_to_ptr.vmem [resolvable:$true] %s16
      %19 = dma.hbm_to_vmem [thread:$0]  %s0, 128, %s17, [#allocation3]
    $region5: #{tpu_custom_call.1} parent=1 // pred_fallthru
      _
    // Predicated region
    $region6: #{tpu_custom_call.1} parent=1 // pred_check
      _
    $region7: #{tpu_custom_call.1} parent=1 // pred_check_branch
      %21 = sbr.rel (0) target = $region9
    $region8: #{tpu_custom_call.1} parent=1 // pred_region
      %s23 = ssub.s32 1024, 1024
      %24 = vsyncadd [#allocation6], %s23
      %s25 = sshll.u32 [#allocation5], 4
      %s26 = int_to_ptr.vmem [resolvable:$true] %s25
      %31 = dma.hbm_to_vmem [thread:$0]  %s1, 1024, %s26, [#allocation6], 128, 128, 8
    $region9: #{tpu_custom_call.1} parent=1 // pred_fallthru
      _
    // Predicated region
    $region10: #{tpu_custom_call.1} parent=1 // pred_check
      _
    $region11: #{tpu_custom_call.1} parent=1 // pred_check_branch
      %33 = sbr.rel (0) target = $region13
    $region12: #{tpu_custom_call.1} parent=1 // pred_region
      %34 = dma.done [#allocation3], 128
    $region13: #{tpu_custom_call.1} parent=1 // pred_fallthru
      _
    // Predicated region
    $region14: #{tpu_custom_call.1} parent=1 // pred_check
      _
    $region15: #{tpu_custom_call.1} parent=1 // pred_check_branch
      %36 = sbr.rel (0) target = $region17
    $region16: #{tpu_custom_call.1} parent=1 // pred_region
      %37 = dma.done [#allocation6], 1024
    $region17: #{tpu_custom_call.1} parent=1 // pred_fallthru
      _
    %v38 = vld [vmem:[#allocation5] sm:$0xff]
    %v39 = vld [vmem:[#allocation5 + $0x8] sm:$0xff]
    %v40 = vld [vmem:[#allocation5 + $0x10] sm:$0xff]
    %v41 = vld [vmem:[#allocation5 + $0x18] sm:$0xff]
    %v42 = vld [vmem:[#allocation5 + $0x20] sm:$0xff]
    %v43 = vld [vmem:[#allocation5 + $0x28] sm:$0xff]
    %v44 = vld [vmem:[#allocation5 + $0x30] sm:$0xff]
    %v45 = vld [vmem:[#allocation5 + $0x38] sm:$0xff]
    %v46 = vld [vmem:[#allocation5] sm:$0xff]
    %v47 = vld [vmem:[#allocation5 + $0x8] sm:$0xff]
    %v48 = vld [vmem:[#allocation5 + $0x10] sm:$0xff]
    %v49 = vld [vmem:[#allocation5 + $0x18] sm:$0xff]
    %v50 = vld [vmem:[#allocation5 + $0x20] sm:$0x1]
    %v51 = vld [vmem:[#allocation5 + $0x10] sm:$0x1]
    %v52 = vld [vmem:[#allocation2] sm:$0xff]
    %v53 = vlaneseq
    %v54 = vshrl.u32 %v53, 7
    %v55 = vsub.s32 0, %v54
    %v56 = vrot.slane %v51, %v55
    %58 = vrot.lane.b32.xlu0 %v56, 48
    %v59 = vpop.permute.xlu0 %58
    %vm61 = vcmask 523264
    %v63 = vsel %vm61, %v52, 0
    %65 = vmatprep.subr.mxu0 0.0
    %66 = vmatpush1.msra.mxu0 0.0
    %67 = vmatprep.subr.mxu0 0.0
    %68 = vmatpush1.msra.mxu0 0.0
    %69 = vmatprep.subr.mxu0 0.0
    %70 = vmatpush1.msra.mxu0 0.0
    %71 = vmatprep.subr.mxu0 0.0
    %72 = vmatpush1.msra.mxu0 0.0
    %73 = vmatprep.subr.mxu0 0.0
    %74 = vmatpush1.msra.mxu0 0.0
    %75 = vmatprep.subr.mxu0 0.0
    %76 = vmatpush1.msra.mxu0 0.0
    %77 = vmatprep.subr.mxu0 0.0
    %78 = vmatpush1.msra.mxu0 0.0
    %79 = vmatprep.subr.mxu0 0.0
    %80 = vmatpush1.msra.mxu0 0.0
    %81 = vmatprep.subr.mxu0 0.0
    %82 = vmatpush1.msra.mxu0 %v45
    %83 = vmatprep.subr.mxu0 0.0
    %84 = vmatpush1.msra.mxu0 %v44
    %85 = vmatprep.subr.mxu0 0.0
    %86 = vmatpush1.msra.mxu0 %v43
    %87 = vmatprep.subr.mxu0 0.0
    %88 = vmatpush1.msra.mxu0 %v42
    %89 = vmatprep.subr.mxu0 0.0
    %90 = vmatpush1.msra.mxu0 %v41
    %91 = vmatprep.subr.mxu0 0.0
    %92 = vmatpush1.msra.mxu0 %v40
    %93 = vmatprep.subr.mxu0 0.0
    %94 = vmatpush1.msra.mxu0 %v39
    %95 = vmatprep.subr.mxu0 0.0
    %96 = vmatpush1.msra.mxu0 %v38
    %97 = vmatprep.subr.mxu0 0.0
    %98 = vmatpush2.msra.mxu0 0.0
    %99 = vmatprep.subr.mxu0 0.0
    %100 = vmatpush2.msra.mxu0 0.0
    %101 = vmatprep.subr.mxu0 0.0
    %102 = vmatpush2.msra.mxu0 0.0
    %103 = vmatprep.subr.mxu0 0.0
    %104 = vmatpush2.msra.mxu0 0.0
    %105 = vmatprep.subr.mxu0 0.0
    %106 = vmatpush2.msra.mxu0 0.0
    %107 = vmatprep.subr.mxu0 0.0
    %108 = vmatpush2.msra.mxu0 0.0
    %109 = vmatprep.subr.mxu0 0.0
    %110 = vmatpush2.msra.mxu0 0.0
    %111 = vmatprep.subr.mxu0 0.0
    %112 = vmatpush2.msra.mxu0 0.0
    %113 = vmatprep.subr.mxu0 0.0
    %114 = vmatpush2.msra.mxu0 0.0
    %115 = vmatprep.subr.mxu0 0.0
    %116 = vmatpush2.msra.mxu0 0.0
    %117 = vmatprep.subr.mxu0 0.0
    %118 = vmatpush2.msra.mxu0 0.0
    %119 = vmatprep.subr.mxu0 0.0
    %120 = vmatpush2.msra.mxu0 0.0
    %121 = vmatprep.subr.mxu0 0.0
    %122 = vmatpush2.msra.mxu0 0.0
    %123 = vmatprep.subr.mxu0 0.0
    %124 = vmatpush2.msra.mxu0 0.0
    %125 = vmatprep.subr.mxu0 0.0
    %126 = vmatpush2.msra.mxu0 0.0
    %127 = vmatprep.subr.mxu0 0.0
    %128 = vmatpush2.msra.mxu0 0.0
    %129 = vmatprep.mubr.f32.mxu0 0.0
    %130 = vmatmul.mubr.f32.gmra.mxu0 %v63
    %v131 = vpop.f32.mrf.mxu0
    %v132 = vadd.f32 %v59, %v131
    %v133 = vpop.f32.mrf.mxu0
    %134 = vdwg.mxu0
    %v135 = vtanh.pop %v132
    %v136 = vlaneseq
    %v137 = vshrl.u32 %v136, 7
    %v138 = vsub.s32 0, %v137
    %v139 = vrot.slane %v50, %v138
    %144 = vrot.lane.b32.xlu0 %v46, 64
    %v145 = vpop.permute.xlu0 %144
    %146 = vrot.lane.b32.xlu0 %v47, 64
    %v147 = vpop.permute.xlu0 %146
    %148 = vrot.lane.b32.xlu0 %v48, 64
    %v149 = vpop.permute.xlu0 %148
    %150 = vrot.lane.b32.xlu0 %v49, 64
    %v151 = vpop.permute.xlu0 %150
    %157 = vrot.lane.b32.xlu0 %v139, 64
    %v158 = vpop.permute.xlu0 %157
    %vm160 = vcmask 261120
    %v162 = vsel %vm160, %v135, 0
    %164 = vmatprep.subr.mxu0 0.0
    %165 = vmatpush1.msra.mxu0 0.0
    %166 = vmatprep.subr.mxu0 0.0
    %167 = vmatpush1.msra.mxu0 0.0
    %168 = vmatprep.subr.mxu0 0.0
    %169 = vmatpush1.msra.mxu0 0.0
    %170 = vmatprep.subr.mxu0 0.0
    %171 = vmatpush1.msra.mxu0 0.0
    %172 = vmatprep.subr.mxu0 0.0
    %173 = vmatpush1.msra.mxu0 0.0
    %174 = vmatprep.subr.mxu0 0.0
    %175 = vmatpush1.msra.mxu0 0.0
    %176 = vmatprep.subr.mxu0 0.0
    %177 = vmatpush1.msra.mxu0 0.0
    %178 = vmatprep.subr.mxu0 0.0
    %179 = vmatpush1.msra.mxu0 0.0
    %180 = vmatprep.subr.mxu0 0.0
    %181 = vmatpush1.msra.mxu0 0.0
    %182 = vmatprep.subr.mxu0 0.0
    %183 = vmatpush1.msra.mxu0 0.0
    %184 = vmatprep.subr.mxu0 0.0
    %185 = vmatpush1.msra.mxu0 0.0
    %186 = vmatprep.subr.mxu0 0.0
    %187 = vmatpush1.msra.mxu0 0.0
    %188 = vmatprep.subr.mxu0 0.0
    %189 = vmatpush1.msra.mxu0 %v151
    %190 = vmatprep.subr.mxu0 0.0
    %191 = vmatpush1.msra.mxu0 %v149
    %192 = vmatprep.subr.mxu0 0.0
    %193 = vmatpush1.msra.mxu0 %v147
    %194 = vmatprep.subr.mxu0 0.0
    %195 = vmatpush1.msra.mxu0 %v145
    %196 = vmatprep.subr.mxu0 0.0
    %197 = vmatpush2.msra.mxu0 0.0
    %198 = vmatprep.subr.mxu0 0.0
    %199 = vmatpush2.msra.mxu0 0.0
    %200 = vmatprep.subr.mxu0 0.0
    %201 = vmatpush2.msra.mxu0 0.0
    %202 = vmatprep.subr.mxu0 0.0
    %203 = vmatpush2.msra.mxu0 0.0
    %204 = vmatprep.subr.mxu0 0.0
    %205 = vmatpush2.msra.mxu0 0.0
    %206 = vmatprep.subr.mxu0 0.0
    %207 = vmatpush2.msra.mxu0 0.0
    %208 = vmatprep.subr.mxu0 0.0
    %209 = vmatpush2.msra.mxu0 0.0
    %210 = vmatprep.subr.mxu0 0.0
    %211 = vmatpush2.msra.mxu0 0.0
    %212 = vmatprep.subr.mxu0 0.0
    %213 = vmatpush2.msra.mxu0 0.0
    %214 = vmatprep.subr.mxu0 0.0
    %215 = vmatpush2.msra.mxu0 0.0
    %216 = vmatprep.subr.mxu0 0.0
    %217 = vmatpush2.msra.mxu0 0.0
    %218 = vmatprep.subr.mxu0 0.0
    %219 = vmatpush2.msra.mxu0 0.0
    %220 = vmatprep.subr.mxu0 0.0
    %221 = vmatpush2.msra.mxu0 0.0
    %222 = vmatprep.subr.mxu0 0.0
    %223 = vmatpush2.msra.mxu0 0.0
    %224 = vmatprep.subr.mxu0 0.0
    %225 = vmatpush2.msra.mxu0 0.0
    %226 = vmatprep.subr.mxu0 0.0
    %227 = vmatpush2.msra.mxu0 0.0
    %228 = vmatprep.mubr.f32.mxu0 0.0
    %229 = vmatmul.mubr.f32.gmra.mxu0 %v162
    %v230 = vpop.f32.mrf.mxu0
    %v231 = vadd.f32 %v158, %v230
    %v232 = vpop.f32.mrf.mxu0
    %233 = vdwg.mxu0
    %vm234 = vcmask 130048
    %v235 = vsel %vm234, %v231, -inf
    %236 = vmax.xlane.f32.xlu0 %v235
    %v237 = vpop.xlane.xlu0 %236
    %v238 = vlaneseq
    %v239 = vand.u32 %v238, 127
    %vm240 = vcmp.eq.f32.partialorder %v231, %v237
    %v241 = vsel %vm240, %v239, 16
    %v242 = vsel %vm234, %v241, 2147483647
    %v243 = vand.u32 %v242, 65535
    %v244 = vshra.s32 %v242, 16
    %v245 = vcvt.s32.f32 %v243
    %v246 = vcvt.s32.f32 %v244
    %247 = vmin.xlane.f32.xlu0 %v246
    %v248 = vpop.xlane.xlu0 %247
    %vm249 = vcmp.eq.f32.partialorder %v246, %v248
    %v250 = vsel %vm249, %v245, inf
    %251 = vmin.xlane.f32.xlu0 %v250
    %v252 = vpop.xlane.xlu0 %251
    %v253 = vcvt.f32.s32 %v252
    %v254 = vcvt.f32.s32 %v248
    %v255 = vshll.u32 %v254, 16
    %v256 = vadd.s32 %v255, %v253
    %vm257 = vcmp.eq.s32.totalorder %v239, %v256
    %v258 = vsel %vm257, 1, 0
    %v259 = vcvt.s32.f32 %v258
    %v260 = vsub.f32 %v231, %v237
    %v261 = vmul.f32 %v260, 1.442695
    %v262 = vpow.pop %v261
    %v263 = vsel %vm234, %v262, 0.0
    %264 = vadd.xlane.f32.xlu0 %v263
    %v265 = vpop.xlane.xlu0 %264
    %v266 = vrcp.pop %v265
    %v267 = vmul.f32 %v262, %v266
    %268 = vrot.lane.b32.xlu0 %v46, 48
    %v269 = vpop.permute.xlu0 %268
    %270 = vrot.lane.b32.xlu0 %v47, 48
    %v271 = vpop.permute.xlu0 %270
    %v275 = vsel %vm234, %v259, 0
    %277 = vmatprep.subr.mxu0 0.0
    %278 = vmatpush1.msra.mxu0 0.0
    %279 = vmatprep.subr.mxu0 0.0
    %280 = vmatpush1.msra.mxu0 0.0
    %281 = vmatprep.subr.mxu0 0.0
    %282 = vmatpush1.msra.mxu0 0.0
    %283 = vmatprep.subr.mxu0 0.0
    %284 = vmatpush1.msra.mxu0 0.0
    %285 = vmatprep.subr.mxu0 0.0
    %286 = vmatpush1.msra.mxu0 0.0
    %287 = vmatprep.subr.mxu0 0.0
    %288 = vmatpush1.msra.mxu0 0.0
    %289 = vmatprep.subr.mxu0 0.0
    %290 = vmatpush1.msra.mxu0 0.0
    %291 = vmatprep.subr.mxu0 0.0
    %292 = vmatpush1.msra.mxu0 0.0
    %293 = vmatprep.subr.mxu0 0.0
    %294 = vmatpush1.msra.mxu0 0.0
    %295 = vmatprep.subr.mxu0 0.0
    %296 = vmatpush1.msra.mxu0 0.0
    %297 = vmatprep.subr.mxu0 0.0
    %298 = vmatpush1.msra.mxu0 0.0
    %299 = vmatprep.subr.mxu0 0.0
    %300 = vmatpush1.msra.mxu0 0.0
    %301 = vmatprep.subr.mxu0 0.0
    %302 = vmatpush1.msra.mxu0 0.0
    %303 = vmatprep.subr.mxu0 0.0
    %304 = vmatpush1.msra.mxu0 0.0
    %305 = vmatprep.subr.mxu0 0.0
    %306 = vmatpush1.msra.mxu0 %v271
    %307 = vmatprep.subr.mxu0 0.0
    %308 = vmatpush1.msra.mxu0 %v269
    %309 = vmatprep.subr.mxu0 0.0
    %310 = vmatpush2.msra.mxu0 0.0
    %311 = vmatprep.subr.mxu0 0.0
    %312 = vmatpush2.msra.mxu0 0.0
    %313 = vmatprep.subr.mxu0 0.0
    %314 = vmatpush2.msra.mxu0 0.0
    %315 = vmatprep.subr.mxu0 0.0
    %316 = vmatpush2.msra.mxu0 0.0
    %317 = vmatprep.subr.mxu0 0.0
    %318 = vmatpush2.msra.mxu0 0.0
    %319 = vmatprep.subr.mxu0 0.0
    %320 = vmatpush2.msra.mxu0 0.0
    %321 = vmatprep.subr.mxu0 0.0
    %322 = vmatpush2.msra.mxu0 0.0
    %323 = vmatprep.subr.mxu0 0.0
    %324 = vmatpush2.msra.mxu0 0.0
    %325 = vmatprep.subr.mxu0 0.0
    %326 = vmatpush2.msra.mxu0 0.0
    %327 = vmatprep.subr.mxu0 0.0
    %328 = vmatpush2.msra.mxu0 0.0
    %329 = vmatprep.subr.mxu0 0.0
    %330 = vmatpush2.msra.mxu0 0.0
    %331 = vmatprep.subr.mxu0 0.0
    %332 = vmatpush2.msra.mxu0 0.0
    %333 = vmatprep.subr.mxu0 0.0
    %334 = vmatpush2.msra.mxu0 0.0
    %335 = vmatprep.subr.mxu0 0.0
    %336 = vmatpush2.msra.mxu0 0.0
    %337 = vmatprep.subr.mxu0 0.0
    %338 = vmatpush2.msra.mxu0 0.0
    %339 = vmatprep.subr.mxu0 0.0
    %340 = vmatpush2.msra.mxu0 0.0
    %341 = vmatprep.mubr.f32.mxu0 0.0
    %342 = vmatmul.mubr.f32.gmra.mxu0 %v275
    %v343 = vpop.f32.mrf.mxu0
    %v344 = vadd.f32 0.0, %v343
    %v345 = vpop.f32.mrf.mxu0
    %346 = vdwg.mxu0
    %347 = vrot.lane.b32.xlu0 %v46, 96
    %v348 = vpop.permute.xlu0 %347
    %349 = vrot.lane.b32.xlu0 %v47, 96
    %v350 = vpop.permute.xlu0 %349
    %351 = vrot.lane.b32.xlu0 %v48, 96
    %v352 = vpop.permute.xlu0 %351
    %353 = vrot.lane.b32.xlu0 %v49, 96
    %v354 = vpop.permute.xlu0 %353
    %v360 = vsel %vm160, %v344, 0
    %362 = vmatprep.subr.mxu0 0.0
    %363 = vmatpush1.msra.mxu0 0.0
    %364 = vmatprep.subr.mxu0 0.0
    %365 = vmatpush1.msra.mxu0 0.0
    %366 = vmatprep.subr.mxu0 0.0
    %367 = vmatpush1.msra.mxu0 0.0
    %368 = vmatprep.subr.mxu0 0.0
    %369 = vmatpush1.msra.mxu0 0.0
    %370 = vmatprep.subr.mxu0 0.0
    %371 = vmatpush1.msra.mxu0 0.0
    %372 = vmatprep.subr.mxu0 0.0
    %373 = vmatpush1.msra.mxu0 0.0
    %374 = vmatprep.subr.mxu0 0.0
    %375 = vmatpush1.msra.mxu0 0.0
    %376 = vmatprep.subr.mxu0 0.0
    %377 = vmatpush1.msra.mxu0 0.0
    %378 = vmatprep.subr.mxu0 0.0
    %379 = vmatpush1.msra.mxu0 0.0
    %380 = vmatprep.subr.mxu0 0.0
    %381 = vmatpush1.msra.mxu0 0.0
    %382 = vmatprep.subr.mxu0 0.0
    %383 = vmatpush1.msra.mxu0 0.0
    %384 = vmatprep.subr.mxu0 0.0
    %385 = vmatpush1.msra.mxu0 0.0
    %386 = vmatprep.subr.mxu0 0.0
    %387 = vmatpush1.msra.mxu0 %v354
    %388 = vmatprep.subr.mxu0 0.0
    %389 = vmatpush1.msra.mxu0 %v352
    %390 = vmatprep.subr.mxu0 0.0
    %391 = vmatpush1.msra.mxu0 %v350
    %392 = vmatprep.subr.mxu0 0.0
    %393 = vmatpush1.msra.mxu0 %v348
    %394 = vmatprep.subr.mxu0 0.0
    %395 = vmatpush2.msra.mxu0 0.0
    %396 = vmatprep.subr.mxu0 0.0
    %397 = vmatpush2.msra.mxu0 0.0
    %398 = vmatprep.subr.mxu0 0.0
    %399 = vmatpush2.msra.mxu0 0.0
    %400 = vmatprep.subr.mxu0 0.0
    %401 = vmatpush2.msra.mxu0 0.0
    %402 = vmatprep.subr.mxu0 0.0
    %403 = vmatpush2.msra.mxu0 0.0
    %404 = vmatprep.subr.mxu0 0.0
    %405 = vmatpush2.msra.mxu0 0.0
    %406 = vmatprep.subr.mxu0 0.0
    %407 = vmatpush2.msra.mxu0 0.0
    %408 = vmatprep.subr.mxu0 0.0
    %409 = vmatpush2.msra.mxu0 0.0
    %410 = vmatprep.subr.mxu0 0.0
    %411 = vmatpush2.msra.mxu0 0.0
    %412 = vmatprep.subr.mxu0 0.0
    %413 = vmatpush2.msra.mxu0 0.0
    %414 = vmatprep.subr.mxu0 0.0
    %415 = vmatpush2.msra.mxu0 0.0
    %416 = vmatprep.subr.mxu0 0.0
    %417 = vmatpush2.msra.mxu0 0.0
    %418 = vmatprep.subr.mxu0 0.0
    %419 = vmatpush2.msra.mxu0 0.0
    %420 = vmatprep.subr.mxu0 0.0
    %421 = vmatpush2.msra.mxu0 0.0
    %422 = vmatprep.subr.mxu0 0.0
    %423 = vmatpush2.msra.mxu0 0.0
    %424 = vmatprep.subr.mxu0 0.0
    %425 = vmatpush2.msra.mxu0 0.0
    %426 = vmatprep.mubr.f32.mxu0 0.0
    %427 = vmatmul.mubr.f32.gmra.mxu0 %v360
    %v428 = vpop.f32.mrf.mxu0
    %v429 = vadd.f32 0.0, %v428
    %v430 = vpop.f32.mrf.mxu0
    %431 = vdwg.mxu0
    %433 = vrot.lane.b32.xlu0 %v429, 64
    %v434 = vpop.permute.xlu0 %433
    %v436 = vmul.f32 %v52, %v434
    %438 = vrot.lane.b32.xlu0 %v436, 64
    %v439 = vpop.permute.xlu0 %438
    %v441 = vsel %vm160, %v439, 0.0
    %442 = vadd.xlane.f32.xlu0 %v441
    %v443 = vpop.xlane.xlu0 %442
    %444 = vrot.lane.b32.xlu0 %v429, 96
    %v445 = vpop.permute.xlu0 %444
    %v447 = vmul.f32 %v52, %v445
    %449 = vrot.lane.b32.xlu0 %v447, 32
    %v450 = vpop.permute.xlu0 %449
    %v452 = vsel %vm160, %v450, 0.0
    %453 = vadd.xlane.f32.xlu0 %v452
    %v454 = vpop.xlane.xlu0 %453
    %vm455 = vcmask 7168
    %v456 = vsel %vm455, %v443, %v454
    %vm457 = vcmask 15360
    %v458 = vsel %vm457, %v456, -inf
    %459 = vmax.xlane.f32.xlu0 %v458
    %v460 = vpop.xlane.xlu0 %459
    %vm461 = vcmp.eq.f32.partialorder %v456, %v460
    %v462 = vsel %vm461, %v239, 2
    %v463 = vsel %vm457, %v462, 2147483647
    %v464 = vand.u32 %v463, 65535
    %v465 = vshra.s32 %v463, 16
    %v466 = vcvt.s32.f32 %v464
    %v467 = vcvt.s32.f32 %v465
    %468 = vmin.xlane.f32.xlu0 %v467
    %v469 = vpop.xlane.xlu0 %468
    %vm470 = vcmp.eq.f32.partialorder %v467, %v469
    %v471 = vsel %vm470, %v466, inf
    %472 = vmin.xlane.f32.xlu0 %v471
    %v473 = vpop.xlane.xlu0 %472
    %v474 = vcvt.f32.s32 %v473
    %v475 = vcvt.f32.s32 %v469
    %v476 = vshll.u32 %v475, 16
    %v477 = vadd.s32 %v476, %v474
    %vm478 = vcmp.eq.s32.totalorder %v239, %v477
    %v479 = vsel %vm478, 1, 0
    %v480 = vcvt.s32.f32 %v479
    %v481 = vsub.f32 %v456, %v460
    %v482 = vmul.f32 %v481, 1.442695
    %v483 = vpow.pop %v482
    %v484 = vsel %vm457, %v483, 0.0
    %485 = vadd.xlane.f32.xlu0 %v484
    %v486 = vpop.xlane.xlu0 %485
    %v487 = vrcp.pop %v486
    %v488 = vmul.f32 %v483, %v487
    %490 = vrot.lane.b32.xlu0 %v267, 16
    %v491 = vpop.permute.xlu0 %490
    %493 = vrot.lane.b32.xlu0 %v135, 32
    %v494 = vpop.permute.xlu0 %493
    %496 = vrot.lane.b32.xlu0 %v344, 64
    %v497 = vpop.permute.xlu0 %496
    %500 = vrot.lane.b32.xlu0 %v480, 96
    %v501 = vpop.permute.xlu0 %500
    %504 = vrot.lane.b32.xlu0 %v488, 98
    %v505 = vpop.permute.xlu0 %504
    %v507 = vsel %vm234, %v259, %v491
    %v508 = vsel %vm160, %v507, %v494
    %v509 = vsel %vm61, %v508, %v497
    %vm510 = vcmask 785408
    %v511 = vsel %vm510, %v509, %v501
    %vm512 = vcmask 801792
    %v513 = vsel %vm512, %v511, %v505
    %vm514 = vcmask 818176
    %v515 = vsel %vm514, %v513, 0.0
    %516 = vst [vmem:[#allocation7] sm:$0xff] %v515
    // Predicated region
    $region18: #{tpu_custom_call.1} parent=1 // pred_check
      _
    $region19: #{tpu_custom_call.1} parent=1 // pred_check_branch
      %518 = sbr.rel (0) target = $region21
    $region20: #{tpu_custom_call.1} parent=1 // pred_region
      %s520 = ssub.s32 128, 128
      %521 = vsyncadd [#allocation4], %s520
      %s523 = sshll.u32 [#allocation7], 4
      %s524 = int_to_ptr.vmem [resolvable:$true] %s523
      %526 = dma.vmem_to_hbm [thread:$0]  %s524, 128, %s2, [#allocation4]
    $region21: #{tpu_custom_call.1} parent=1 // pred_fallthru
      _
    // Predicated region
    $region22: #{tpu_custom_call.1} parent=1 // pred_check
      _
    $region23: #{tpu_custom_call.1} parent=1 // pred_check_branch
      %528 = sbr.rel (0) target = $region25
    $region24: #{tpu_custom_call.1} parent=1 // pred_region
      %529 = dma.done [#allocation4], 128
    $region25: #{tpu_custom_call.1} parent=1 // pred_fallthru
      _
    %530 = vsyncpa [#allocation3], 1
    %531 = vsyncpa [#allocation6], 1
    %532 = vsyncpa [#allocation4], 1

</llo_original>
